<compile_context>
chip_gen: v7x
topology: tpu7x:2x2x1
jax: 0.10.0
libtpu: 0.0.40
codegen_flags: <defaults>
</compile_context>

<pallas_src>
import functools

import jax
import jax.numpy as jnp
from jax.experimental import pallas as pl
from jax.experimental.pallas import tpu as pltpu


# ------------------------------ helpers ------------------------------

def _round_up(x, m):
    return ((x + m - 1) // m) * m


def _vmem_capacity_bytes():
    try:
        return pltpu.get_tpu_info().vmem_capacity_bytes
    except Exception:
        return 128 * 1024 * 1024  # v5e/v6e default


def _pick_lane_tile(full, tmax):
    """Tile for a lane/contraction dim: multiple of 128 dividing `full`, or `full`."""
    if full <= tmax:
        return full
    t = (tmax // 128) * 128
    while t >= 128:
        if full % t == 0:
            return t
        t -= 128
    return full  # fallback: single (possibly large) block


# ----------------------------- tiled linear -----------------------------

def _linear_kernel(x_ref, w_ref, b_ref, o_ref, acc_ref, *, compute_dtype):
    @pl.when(pl.program_id(2) == 0)
    def _():
        acc_ref[...] = jnp.zeros_like(acc_ref)

    # bf16 operands on the MXU, f32 accumulation (review: v6e/v7x MXU peak is bf16).
    acc_ref[...] += jnp.dot(x_ref[...].astype(compute_dtype),
                            w_ref[...].astype(compute_dtype),
                            preferred_element_type=jnp.float32)

    @pl.when(pl.program_id(2) == pl.num_programs(2) - 1)
    def _():
        o_ref[...] = (acc_ref[...] + b_ref[...].astype(jnp.float32)).astype(o_ref.dtype)


def linear_pallas(x, w, b, *, compute_dtype=jnp.bfloat16):
    """x: [M, K], w: [K, N], b: [N] -> [M, N], tiled over (M, N, K)."""
    M, K = x.shape
    _, N = w.shape

    small_vmem = _vmem_capacity_bytes() <= 64 * 1024 * 1024     # v7x: halve tiles
    tm_max, tk_max, tn_max = (128, 256, 512) if small_vmem else (256, 512, 512)

    tm = min(tm_max, _round_up(M, 8))
    tk = _pick_lane_tile(K, tk_max)                             # divides K exactly
    tn = _pick_lane_tile(N, tn_max)

    grid = (pl.cdiv(M, tm), pl.cdiv(N, tn), pl.cdiv(K, tk))
    kernel = functools.partial(_linear_kernel, compute_dtype=compute_dtype)

    return pl.pallas_call(
        kernel,
        out_shape=jax.ShapeDtypeStruct((M, N), x.dtype),
        grid_spec=pltpu.PrefetchScalarGridSpec(
            num_scalar_prefetch=0,
            grid=grid,
            in_specs=[pl.BlockSpec((tm, tk), lambda i, j, k: (i, k)),
                      pl.BlockSpec((tk, tn), lambda i, j, k: (k, j)),
                      pl.BlockSpec((1, tn), lambda i, j, k: (0, j))],
            out_specs=pl.BlockSpec((tm, tn), lambda i, j, k: (i, j)),
            scratch_shapes=[pltpu.VMEM((tm, tn), jnp.float32)]),
        compiler_params=pltpu.CompilerParams(
            dimension_semantics=("parallel", "parallel", "arbitrary")),
    )(x, w, b.reshape(1, N))


# --------------------- batched perceiver cross-attention ---------------------

def _perceiver_kernel(lat_ref, tok_ref, o_ref):
    # lat_ref: [n, d]; tok_ref: [bt, v, d]; o_ref: [bt, n, d]
    lat = lat_ref[...].astype(jnp.float32)
    tok = tok_ref[...].astype(jnp.float32)
    bt, v, d = tok.shape
    n = lat.shape[0]

    latb = jnp.broadcast_to(lat[None], (bt, n, d))              # [bt, n, d]
    scale = 1.0 / (float(d) ** 0.5)
    # Contract on last dims of both operands (no materialized transpose).
    s = jnp.einsum('bnd,bvd->bnv', latb, tok,
                   preferred_element_type=jnp.float32) * scale  # [bt, n, v]
    s = s - jnp.max(s, axis=-1, keepdims=True)
    p = jnp.exp(s)
    attn = p * pl.reciprocal(jnp.sum(p, axis=-1, keepdims=True), approx=True)
    ctx = jnp.einsum('bnv,bvd->bnd', attn, tok,
                     preferred_element_type=jnp.float32)        # [bt, n, d]
    o_ref[...] = (latb + ctx).astype(o_ref.dtype)


def perceiver_pallas(latents, tokens, *, bt_max=8):
    """latents: [n, d], tokens: [BS, v, d] -> [BS, n, d]; bt (b,s) slices per step."""
    BS, v, d = tokens.shape
    n = latents.shape[0]
    bt = min(bt_max, BS)
    return pl.pallas_call(
        _perceiver_kernel,
        out_shape=jax.ShapeDtypeStruct((BS, n, d), tokens.dtype),
        grid=(pl.cdiv(BS, bt),),
        in_specs=[pl.BlockSpec((n, d), lambda ib: (0, 0)),
                  pl.BlockSpec((bt, v, d), lambda ib: (ib, 0, 0))],
        out_specs=pl.BlockSpec((bt, n, d), lambda ib: (ib, 0, 0)),
        compiler_params=pltpu.CompilerParams(dimension_semantics=("parallel",)),
    )(latents, tokens)


# -------------------- embedding lookup as a row gather --------------------
# Replaces one_hot(text) @ [B-replicated table]:
#  - token ids are scalar-prefetched into SMEM,
#  - pl.Element index maps DMA only the single needed row of either the shared
#    [V_base, D] text table or the flattened [B*T, D] vision projections,
#  - the kernel blends the two candidate rows based on id < V_base.
# Ids are clamped in the index maps (out-of-range ids never fetch OOB rows).

def _embed_gather_kernel(tok_ref, base_row_ref, proj_row_ref, o_ref, *, v_base):
    b = pl.program_id(0)
    l = pl.program_id(1)
    use_base = (tok_ref[b, l] < v_base).astype(o_ref.dtype)     # scalar 0/1
    row = base_row_ref[...] * use_base + proj_row_ref[...] * (1.0 - use_base)
    o_ref[0] = row.astype(o_ref.dtype)                          # [1, D]


def embed_gather_pallas(text_input, base_table, proj_flat, num_img_tokens):
    """text_input: [B, L] int32, base_table: [V_base, D], proj_flat: [B*T, D]
    -> [B, L, D], equivalent to one_hot(text) @ concat(table, proj) per batch."""
    B, L = text_input.shape
    v_base, D = base_table.shape
    T = num_img_tokens

    kernel = functools.partial(_embed_gather_kernel, v_base=v_base)

    def base_map(b, l, tok):
        return (jnp.clip(tok[b, l], 0, v_base - 1), 0)

    def proj_map(b, l, tok):
        return (b * T + jnp.clip(tok[b, l] - v_base, 0, T - 1), 0)

    return pl.pallas_call(
        kernel,
        out_shape=jax.ShapeDtypeStruct((B, L, D), base_table.dtype),
        grid_spec=pltpu.PrefetchScalarGridSpec(
            num_scalar_prefetch=1,
            grid=(B, L),
            in_specs=[pl.BlockSpec((pl.Element(1), D), base_map),
                      pl.BlockSpec((pl.Element(1), D), proj_map)],
            out_specs=pl.BlockSpec((1, 1, D), lambda b, l, tok: (b, l, 0))),
        compiler_params=pltpu.CompilerParams(
            dimension_semantics=("parallel", "arbitrary")),
    )(text_input.astype(jnp.int32), base_table, proj_flat)


# --------------------------- params + forward glue ---------------------------

def init_params(key, num_embeddings, embedding_dim, perceiver_num, vis_dim, patch_dim):
    ks = jax.random.split(key, 6)
    return {
        # nn.Parameter(torch.randn(...)) equivalents
        "weight": jax.random.normal(ks[0], (num_embeddings, embedding_dim), jnp.float32),
        "figure_token_weight": jax.random.normal(ks[1], (2, embedding_dim), jnp.float32),
        # ViT patch-embedding projection
        "patch_w": 0.02 * jax.random.normal(ks[2], (patch_dim, vis_dim), jnp.float32),
        "patch_b": jnp.zeros((vis_dim,), jnp.float32),
        # Perceiver latents
        "latents": 0.02 * jax.random.normal(ks[3], (perceiver_num, vis_dim), jnp.float32),
        # self.fc : vis_dim -> embedding_dim
        "fc_w": 0.02 * jax.random.normal(ks[4], (vis_dim, embedding_dim), jnp.float32),
        "fc_b": jnp.zeros((embedding_dim,), jnp.float32),
    }


def my_embedding_forward(params, text_input, vision_x, patch_size, frame_patch_size):
    """Reproduces MyEmbedding.forward with flag='Text' and key_words_query=None."""
    B, S, C, H, W, Dd = vision_x.shape

    # 'b S c h w d -> (b S) c h w d'
    vx = vision_x.reshape(B * S, C, H, W, Dd)

    # ---- vision_encoder (ViT): patch embedding projection in Pallas ----
    # TODO(synk): the 12-layer ViT transformer stack and its pos_embedding are not
    # reproduced (external module); only the patch-embedding linear is implemented.
    p1 = p2 = patch_size
    pf = frame_patch_size
    h, w, f = H // p1, W // p2, Dd // pf
    # 'bs c (h p1) (w p2) (f pf) -> bs (h w f) (p1 p2 pf c)'
    patches = vx.reshape(B * S, C, h, p1, w, p2, f, pf)
    patches = patches.transpose(0, 2, 4, 6, 3, 5, 7, 1)         # bs h w f p1 p2 pf c
    patch_dim = p1 * p2 * pf * C
    patches = patches.reshape(B * S * h * w * f, patch_dim)
    tokens = linear_pallas(patches, params["patch_w"], params["patch_b"])
    v = h * w * f
    tokens = tokens.reshape(B * S, v, -1)                       # '(b s F) v d' with F=1

    # ---- PerceiverResampler (simplified: single-head cross-attn of latents) ----
    # TODO(synk): full PerceiverResampler (multi-layer gated x-attn + FFN) is an
    # external module; a single batched Pallas cross-attention stands in.
    lat_out = perceiver_pallas(params["latents"], tokens)       # [B*S, n, vis_dim]
    n = lat_out.shape[1]

    # ---- self.fc projection: 'b s n d -> (b s n) d' ; Linear ----
    flat = lat_out.reshape(B * S * n, -1)                        # rows ordered (b, s, n)
    proj = linear_pallas(flat, params["fc_w"], params["fc_b"])   # [B*T, embed_dim], T=S*n

    # ---- embedding lookup: shared table + per-batch vision rows, gathered ----
    # (No B-replicated table and no one-hot matmul; semantics match
    #  matmul(one_hot(text), cat([weight; figure_tokens; proj_b], dim=0)).)
    base_table = jnp.concatenate([params["weight"], params["figure_token_weight"]], axis=0)
    T = S * n
    out = embed_gather_pallas(text_input, base_table, proj, T)   # [B, L, embed_dim]

    loss_matching = None                                         # key_words_query is None
    return out, loss_matching


# --------------------------------- main ---------------------------------

if __name__ == "__main__":
    key = jax.random.PRNGKey(0)

    # Small, self-consistent shapes.
    num_embeddings, embedding_dim = 64, 32
    perceiver_num, vis_dim = 4, 32
    patch_size, frame_patch_size = 8, 2
    B, S, C, H, W, Dd = 2, 1, 3, 16, 16, 4
    L = 8

    patch_dim = patch_size * patch_size * frame_patch_size * C
    k_params, k_vis, k_txt = jax.random.split(key, 3)
    params = init_params(k_params, num_embeddings, embedding_dim,
                         perceiver_num, vis_dim, patch_dim)

    vision_x = jax.random.normal(k_vis, (B, S, C, H, W, Dd), jnp.float32)
    V_total = num_embeddings + 2 + S * perceiver_num
    text_input = jax.random.randint(k_txt, (B, L), 0, V_total, dtype=jnp.int32)

    out, loss_matching = my_embedding_forward(
        params, text_input, vision_x, patch_size, frame_patch_size)
    out = jax.block_until_ready(out)

    assert out.shape == (B, L, embedding_dim), out.shape
    assert loss_matching is None
    print("KERNEL_OK")
</pallas_src>

<mosaic_0001>
module attributes {stable_mosaic.version = 11 : i64} {
  func.func @_linear_kernel(%arg0: i32, %arg1: i32, %arg2: i32, %arg3: memref<16x384xf32, #tpu.memory_space<vmem>>, %arg4: memref<384x32xf32, #tpu.memory_space<vmem>>, %arg5: memref<1x32xf32, #tpu.memory_space<vmem>>, %arg6: memref<16x32xf32, #tpu.memory_space<vmem>>, %arg7: memref<16x32xf32, #tpu.memory_space<vmem>>) attributes {dimension_semantics = [#tpu.dimension_semantics<parallel>, #tpu.dimension_semantics<parallel>, #tpu.dimension_semantics<arbitrary>], iteration_bounds = array<i64: 1, 1, 1>, scalar_prefetch = 0 : i64, scratch_operands = 1 : i64, tpu.core_type = #tpu.core_type<tc>, window_params = [{transform_indices = @transform_0, window_bounds = array<i64: 16, 384>}, {transform_indices = @transform_1, window_bounds = array<i64: 384, 32>}, {transform_indices = @transform_2, window_bounds = array<i64: 1, 32>}, {transform_indices = @transform_3, window_bounds = array<i64: 16, 32>}]} {
    %c0_i32 = arith.constant 0 : i32
    %0 = arith.cmpi eq, %arg2, %c0_i32 : i32
    %1 = arith.extui %0 : i1 to i32
    %c0_i32_0 = arith.constant 0 : i32
    %2 = arith.cmpi ne, %1, %c0_i32_0 : i32
    scf.if %2 {
      %cst_10 = arith.constant 0.000000e+00 : f32
      %14 = vector.broadcast %cst_10 : f32 to vector<16x32xf32>
      %c0_11 = arith.constant 0 : index
      %c0_12 = arith.constant 0 : index
      %15 = vector.load %arg7[%c0_11, %c0_12] : memref<16x32xf32, #tpu.memory_space<vmem>>, vector<16x32xf32>
      tpu.vector_store %arg7[%c0_11, %c0_12], %14 {strides = array<i32>} : memref<16x32xf32, #tpu.memory_space<vmem>>, vector<16x32xf32>,
    } else {
    }
    %c0 = arith.constant 0 : index
    %c0_1 = arith.constant 0 : index
    %3 = vector.load %arg7[%c0, %c0_1] : memref<16x32xf32, #tpu.memory_space<vmem>>, vector<16x32xf32>
    %c0_2 = arith.constant 0 : index
    %c0_3 = arith.constant 0 : index
    %4 = vector.load %arg3[%c0_2, %c0_3] : memref<16x384xf32, #tpu.memory_space<vmem>>, vector<16x384xf32>
    %5 = arith.truncf %4 : vector<16x384xf32> to vector<16x384xbf16>
    %c0_4 = arith.constant 0 : index
    %c0_5 = arith.constant 0 : index
    %6 = vector.load %arg4[%c0_4, %c0_5] : memref<384x32xf32, #tpu.memory_space<vmem>>, vector<384x32xf32>
    %7 = arith.truncf %6 : vector<384x32xf32> to vector<384x32xbf16>
    %cst = arith.constant dense<0.000000e+00> : vector<16x32xf32>
    %8 = tpu.matmul %5, %7, %cst {dimension_numbers = #tpu.dot_dimension_numbers<[1], [0], [0], [1], [0, 0, 1, 1], [], []>} : vector<16x384xbf16>, vector<384x32xbf16>, vector<16x32xf32> -> vector<16x32xf32>
    %9 = arith.addf %3, %8 : vector<16x32xf32>
    %c0_6 = arith.constant 0 : index
    %c0_7 = arith.constant 0 : index
    %10 = vector.load %arg7[%c0_6, %c0_7] : memref<16x32xf32, #tpu.memory_space<vmem>>, vector<16x32xf32>
    tpu.vector_store %arg7[%c0_6, %c0_7], %9 {strides = array<i32>} : memref<16x32xf32, #tpu.memory_space<vmem>>, vector<16x32xf32>,
    %c0_i32_8 = arith.constant 0 : i32
    %11 = arith.cmpi eq, %arg2, %c0_i32_8 : i32
    %12 = arith.extui %11 : i1 to i32
    %c0_i32_9 = arith.constant 0 : i32
    %13 = arith.cmpi ne, %12, %c0_i32_9 : i32
    scf.if %13 {
      %c0_10 = arith.constant 0 : index
      %c0_11 = arith.constant 0 : index
      %14 = vector.load %arg7[%c0_10, %c0_11] : memref<16x32xf32, #tpu.memory_space<vmem>>, vector<16x32xf32>
      %c0_12 = arith.constant 0 : index
      %c0_13 = arith.constant 0 : index
      %15 = vector.load %arg5[%c0_12, %c0_13] : memref<1x32xf32, #tpu.memory_space<vmem>>, vector<1x32xf32>
      %16 = vector.broadcast %15 : vector<1x32xf32> to vector<16x32xf32>
      %17 = arith.addf %14, %16 : vector<16x32xf32>
      %c0_14 = arith.constant 0 : index
      %c0_15 = arith.constant 0 : index
      %18 = vector.load %arg6[%c0_14, %c0_15] : memref<16x32xf32, #tpu.memory_space<vmem>>, vector<16x32xf32>
      tpu.vector_store %arg6[%c0_14, %c0_15], %17 {strides = array<i32>} : memref<16x32xf32, #tpu.memory_space<vmem>>, vector<16x32xf32>,
    } else {
    }
    return
  }
  func.func @transform_0(%arg0: i32, %arg1: i32, %arg2: i32) -> (i32, i32) {
    %c0_i32 = arith.constant 0 : i32
    return %arg0, %arg2 : i32, i32
  }
  func.func @transform_1(%arg0: i32, %arg1: i32, %arg2: i32) -> (i32, i32) {
    %c0_i32 = arith.constant 0 : i32
    return %arg2, %arg1 : i32, i32
  }
  func.func @transform_2(%arg0: i32, %arg1: i32, %arg2: i32) -> (i32, i32) {
    %c0_i32 = arith.constant 0 : i32
    %c0_i32_0 = arith.constant 0 : i32
    return %c0_i32, %arg1 : i32, i32
  }
  func.func @transform_3(%arg0: i32, %arg1: i32, %arg2: i32) -> (i32, i32) {
    %c0_i32 = arith.constant 0 : i32
    return %arg0, %arg1 : i32, i32
  }
}

</mosaic_0001>

<llo_original>
// kernel: tpu_custom_call.1
$region0: #{tpu_custom_call.1}
  #allocation0 [shape = 'u32[]', space=smem, size = 0x4, offset = 0x4, fixed_abs, tag = 'smem constant byte address 0x4 - core index']
  #allocation1 [shape = 'u32[144,128]{1,0:T(1,128)}', space=vmem, size = 0x12000, scoped, tag = 'internal scratch']
  #allocation2 [shape = 'f32[16,32]{1,0:T(8,128)}', space=vmem, size = 0x2000, scoped, tag = 'scratch operand']
  %s0 = inlined_call_operand.vmem [shape: f32[16,384], index: 0, kind: input, shape index: {}]
  %s1 = inlined_call_operand.vmem [shape: f32[384,32], index: 1, kind: input, shape index: {}]
  %s2 = inlined_call_operand.vmem [shape: f32[1,32], index: 2, kind: input, shape index: {}]
  %s3 = inlined_call_operand.hbm [shape: f32[16,32], index: 3, kind: output, shape index: {}]
  %s4 = sld [smem:[#allocation0]]
  $region30: #{tpu_custom_call.1} parent=0
    _
  %s6 = ssub.s32 1, %s4
  %s7 = scalar_select 0, %s6, %s4
  $region1: #{tpu_custom_call.1} parent=0
    #allocation3 [shape = 'u8[8192]{0}', space=vmem, size = 0x2000, scoped, tag = 'output window, operand 0, single buffered']
    #allocation4 [shape = 's32[1]{0}', space=sflag, size = 0x4, scoped, tag = 'scoped memory for tpu_custom_call.1']
    %8 = vsyncpa [#allocation4], 0
    // Predicated region
    $region2: #{tpu_custom_call.1} parent=1 // pred_check
      _
    $region3: #{tpu_custom_call.1} parent=1 // pred_check_branch
      %10 = sbr.rel (0) target = $region5
    $region4: #{tpu_custom_call.1} parent=1 // pred_region
      _
    $region5: #{tpu_custom_call.1} parent=1 // pred_fallthru
      _
    // Predicated region
    $region6: #{tpu_custom_call.1} parent=1 // pred_check
      _
    $region7: #{tpu_custom_call.1} parent=1 // pred_check_branch
      %12 = sbr.rel (0) target = $region9
    $region8: #{tpu_custom_call.1} parent=1 // pred_region
      _
    $region9: #{tpu_custom_call.1} parent=1 // pred_fallthru
      _
    // Predicated region
    $region10: #{tpu_custom_call.1} parent=1 // pred_check
      _
    $region11: #{tpu_custom_call.1} parent=1 // pred_check_branch
      %14 = sbr.rel (0) target = $region13
    $region12: #{tpu_custom_call.1} parent=1 // pred_region
      _
    $region13: #{tpu_custom_call.1} parent=1 // pred_fallthru
      _
    %p16 = scmp.eq.s32.totalorder 0, 0
    // Predicated region
    $region14: #{tpu_custom_call.1} parent=1 // pred_check
      %p17 = pneg %p16
    $region15: #{tpu_custom_call.1} parent=1 // pred_check_branch
      %19 = sbr.rel (%p17) target = $region17
    $region16: #{tpu_custom_call.1} parent=1 // pred_region
      %vm20 = vcmask 261120
      %21 = vst.msk [vmem:[#allocation2] sm:$0xff] %vm20, 0.0
      %22 = vst.msk [vmem:[#allocation2 + $0x8] sm:$0xff] %vm20, 0.0
    $region17: #{tpu_custom_call.1} parent=1 // pred_fallthru
      _
    %v23 = vld [vmem:[#allocation2] sm:$0xff]
    %v24 = vld [vmem:[#allocation2 + $0x8] sm:$0xff]
    %v25 = vld [vmem:[%s0] sm:$0xff]
    %v26 = vld [vmem:[%s0 + $0x8] sm:$0xff]
    %v27 = vld [vmem:[%s0 + $0x10] sm:$0xff]
    %v28 = vld [vmem:[%s0 + $0x18] sm:$0xff]
    %v29 = vld [vmem:[%s0 + $0x20] sm:$0xff]
    %v30 = vld [vmem:[%s0 + $0x28] sm:$0xff]
    %v31 = vpack.c.bf16 %v28, %v25
    %v32 = vpack.c.bf16 %v29, %v26
    %v33 = vpack.c.bf16 %v30, %v27
    %v34 = vld [vmem:[%s1] sm:$0xff]
    %v35 = vld [vmem:[%s1 + $0x8] sm:$0xff]
    %v36 = vld [vmem:[%s1 + $0x10] sm:$0xff]
    %v37 = vld [vmem:[%s1 + $0x18] sm:$0xff]
    %v38 = vld [vmem:[%s1 + $0x20] sm:$0xff]
    %v39 = vld [vmem:[%s1 + $0x28] sm:$0xff]
    %v40 = vld [vmem:[%s1 + $0x30] sm:$0xff]
    %v41 = vld [vmem:[%s1 + $0x38] sm:$0xff]
    %v42 = vld [vmem:[%s1 + $0x40] sm:$0xff]
    %v43 = vld [vmem:[%s1 + $0x48] sm:$0xff]
    %v44 = vld [vmem:[%s1 + $0x50] sm:$0xff]
    %v45 = vld [vmem:[%s1 + $0x58] sm:$0xff]
    %v46 = vld [vmem:[%s1 + $0x60] sm:$0xff]
    %v47 = vld [vmem:[%s1 + $0x68] sm:$0xff]
    %v48 = vld [vmem:[%s1 + $0x70] sm:$0xff]
    %v49 = vld [vmem:[%s1 + $0x78] sm:$0xff]
    %v50 = vld [vmem:[%s1 + $0x80] sm:$0xff]
    %v51 = vld [vmem:[%s1 + $0x88] sm:$0xff]
    %v52 = vld [vmem:[%s1 + $0x90] sm:$0xff]
    %v53 = vld [vmem:[%s1 + $0x98] sm:$0xff]
    %v54 = vld [vmem:[%s1 + $0xa0] sm:$0xff]
    %v55 = vld [vmem:[%s1 + $0xa8] sm:$0xff]
    %v56 = vld [vmem:[%s1 + $0xb0] sm:$0xff]
    %v57 = vld [vmem:[%s1 + $0xb8] sm:$0xff]
    %v58 = vld [vmem:[%s1 + $0xc0] sm:$0xff]
    %v59 = vld [vmem:[%s1 + $0xc8] sm:$0xff]
    %v60 = vld [vmem:[%s1 + $0xd0] sm:$0xff]
    %v61 = vld [vmem:[%s1 + $0xd8] sm:$0xff]
    %v62 = vld [vmem:[%s1 + $0xe0] sm:$0xff]
    %v63 = vld [vmem:[%s1 + $0xe8] sm:$0xff]
    %v64 = vld [vmem:[%s1 + $0xf0] sm:$0xff]
    %v65 = vld [vmem:[%s1 + $0xf8] sm:$0xff]
    %v66 = vld [vmem:[%s1 + $0x100] sm:$0xff]
    %v67 = vld [vmem:[%s1 + $0x108] sm:$0xff]
    %v68 = vld [vmem:[%s1 + $0x110] sm:$0xff]
    %v69 = vld [vmem:[%s1 + $0x118] sm:$0xff]
    %v70 = vld [vmem:[%s1 + $0x120] sm:$0xff]
    %v71 = vld [vmem:[%s1 + $0x128] sm:$0xff]
    %v72 = vld [vmem:[%s1 + $0x130] sm:$0xff]
    %v73 = vld [vmem:[%s1 + $0x138] sm:$0xff]
    %v74 = vld [vmem:[%s1 + $0x140] sm:$0xff]
    %v75 = vld [vmem:[%s1 + $0x148] sm:$0xff]
    %v76 = vld [vmem:[%s1 + $0x150] sm:$0xff]
    %v77 = vld [vmem:[%s1 + $0x158] sm:$0xff]
    %v78 = vld [vmem:[%s1 + $0x160] sm:$0xff]
    %v79 = vld [vmem:[%s1 + $0x168] sm:$0xff]
    %v80 = vld [vmem:[%s1 + $0x170] sm:$0xff]
    %v81 = vld [vmem:[%s1 + $0x178] sm:$0xff]
    %v82 = vpack.c.bf16 %v35, %v34
    %v83 = vpack.c.bf16 %v37, %v36
    %v84 = vpack.c.bf16 %v39, %v38
    %v85 = vpack.c.bf16 %v41, %v40
    %v86 = vpack.c.bf16 %v43, %v42
    %v87 = vpack.c.bf16 %v45, %v44
    %v88 = vpack.c.bf16 %v47, %v46
    %v89 = vpack.c.bf16 %v49, %v48
    %v90 = vpack.c.bf16 %v51, %v50
    %v91 = vpack.c.bf16 %v53, %v52
    %v92 = vpack.c.bf16 %v55, %v54
    %v93 = vpack.c.bf16 %v57, %v56
    %v94 = vpack.c.bf16 %v59, %v58
    %v95 = vpack.c.bf16 %v61, %v60
    %v96 = vpack.c.bf16 %v63, %v62
    %v97 = vpack.c.bf16 %v65, %v64
    %v98 = vpack.c.bf16 %v67, %v66
    %v99 = vpack.c.bf16 %v69, %v68
    %v100 = vpack.c.bf16 %v71, %v70
    %v101 = vpack.c.bf16 %v73, %v72
    %v102 = vpack.c.bf16 %v75, %v74
    %v103 = vpack.c.bf16 %v77, %v76
    %v104 = vpack.c.bf16 %v79, %v78
    %v105 = vpack.c.bf16 %v81, %v80
    %106 = vmatprep.subr.bf16.mxu0 0
    %107 = vmatpush1.bf16.msra.mxu0 %v82
    %108 = vmatprep.subr.bf16.mxu0 0
    %109 = vmatpush1.bf16.msra.mxu0 %v83
    %110 = vmatprep.subr.bf16.mxu0 0
    %111 = vmatpush1.bf16.msra.mxu0 %v84
    %112 = vmatprep.subr.bf16.mxu0 0
    %113 = vmatpush1.bf16.msra.mxu0 %v85
    %114 = vmatprep.subr.bf16.mxu0 0
    %115 = vmatpush1.bf16.msra.mxu0 %v86
    %116 = vmatprep.subr.bf16.mxu0 0
    %117 = vmatpush1.bf16.msra.mxu0 %v87
    %118 = vmatprep.subr.bf16.mxu0 0
    %119 = vmatpush1.bf16.msra.mxu0 %v88
    %120 = vmatprep.subr.bf16.mxu0 0
    %121 = vmatpush1.bf16.msra.mxu0 %v89
    %122 = vmatprep.subr.bf16.mxu0 0
    %123 = vmatpush1.bf16.msra.mxu0 %v90
    %124 = vmatprep.subr.bf16.mxu0 0
    %125 = vmatpush1.bf16.msra.mxu0 %v91
    %126 = vmatprep.subr.bf16.mxu0 0
    %127 = vmatpush1.bf16.msra.mxu0 %v92
    %128 = vmatprep.subr.bf16.mxu0 0
    %129 = vmatpush1.bf16.msra.mxu0 %v93
    %130 = vmatprep.subr.bf16.mxu0 0
    %131 = vmatpush1.bf16.msra.mxu0 %v94
    %132 = vmatprep.subr.bf16.mxu0 0
    %133 = vmatpush1.bf16.msra.mxu0 %v95
    %134 = vmatprep.subr.bf16.mxu0 0
    %135 = vmatpush1.bf16.msra.mxu0 %v96
    %136 = vmatprep.subr.bf16.mxu0 0
    %137 = vmatpush1.bf16.msra.mxu0 %v97
    %138 = vmatprep.mubr.bf16.mxu0 %v32
    %139 = vmatmul.mubr.bf16.gmra.mrb[0].mxu0 %v31
    %v140 = vpop.f32.mrb[0].mxu0
    %v141 = vadd.f32 0.0, %v140
    %v142 = vpop.f32.mrb[0].mxu0
    %v143 = vpop.f32.mrb[0].mxu0
    %v144 = vadd.f32 0.0, %v143
    %v145 = vpop.f32.mrb[0].mxu0
    %146 = vdwg.mxu0
    %147 = vmatprep.subr.bf16.mxu0 0
    %148 = vmatpush1.bf16.msra.mxu0 %v98
    %149 = vmatprep.subr.bf16.mxu0 0
    %150 = vmatpush1.bf16.msra.mxu0 %v99
    %151 = vmatprep.subr.bf16.mxu0 0
    %152 = vmatpush1.bf16.msra.mxu0 %v100
    %153 = vmatprep.subr.bf16.mxu0 0
    %154 = vmatpush1.bf16.msra.mxu0 %v101
    %155 = vmatprep.subr.bf16.mxu0 0
    %156 = vmatpush1.bf16.msra.mxu0 %v102
    %157 = vmatprep.subr.bf16.mxu0 0
    %158 = vmatpush1.bf16.msra.mxu0 %v103
    %159 = vmatprep.subr.bf16.mxu0 0
    %160 = vmatpush1.bf16.msra.mxu0 %v104
    %161 = vmatprep.subr.bf16.mxu0 0
    %162 = vmatpush1.bf16.msra.mxu0 %v105
    %163 = vmatprep.subr.bf16.mxu0 0
    %164 = vmatpush1.bf16.msra.mxu0 0
    %165 = vmatprep.subr.bf16.mxu0 0
    %166 = vmatpush1.bf16.msra.mxu0 0
    %167 = vmatprep.subr.bf16.mxu0 0
    %168 = vmatpush1.bf16.msra.mxu0 0
    %169 = vmatprep.subr.bf16.mxu0 0
    %170 = vmatpush1.bf16.msra.mxu0 0
    %171 = vmatprep.subr.bf16.mxu0 0
    %172 = vmatpush1.bf16.msra.mxu0 0
    %173 = vmatprep.subr.bf16.mxu0 0
    %174 = vmatpush1.bf16.msra.mxu0 0
    %175 = vmatprep.subr.bf16.mxu0 0
    %176 = vmatpush1.bf16.msra.mxu0 0
    %177 = vmatprep.subr.bf16.mxu0 0
    %178 = vmatpush1.bf16.msra.mxu0 0
    %179 = vmatprep.mubr.bf16.mxu0 0
    %180 = vmatmul.mubr.bf16.gmra.mrb[0].mxu0 %v33
    %v181 = vpop.f32.mrb[0].mxu0
    %v182 = vadd.f32 %v141, %v181
    %v183 = vpop.f32.mrb[0].mxu0
    %v184 = vpop.f32.mrb[0].mxu0
    %v185 = vadd.f32 %v144, %v184
    %v186 = vpop.f32.mrb[0].mxu0
    %187 = vdwg.mxu0
    %v188 = vadd.f32 %v23, %v182
    %v189 = vadd.f32 %v24, %v185
    %vm190 = vcmask 261120
    %191 = vst.msk [vmem:[#allocation2] sm:$0xff] %vm190, %v188
    %192 = vst.msk [vmem:[#allocation2 + $0x8] sm:$0xff] %vm190, %v189
    // Predicated region
    $region18: #{tpu_custom_call.1} parent=1 // pred_check
      %p193 = pneg %p16
    $region19: #{tpu_custom_call.1} parent=1 // pred_check_branch
      %195 = sbr.rel (%p193) target = $region21
    $region20: #{tpu_custom_call.1} parent=1 // pred_region
      %v196 = vld [vmem:[#allocation2] sm:$0xff]
      %v197 = vld [vmem:[#allocation2 + $0x8] sm:$0xff]
      %v198 = vld [vmem:[%s2] sm:$0x1]
      %v200 = vlaneseq
      %v201 = vshrl.u32 %v200, 7
      %v202 = vsub.s32 0, %v201
      %v203 = vrot.slane %v198, %v202
      %v205 = vadd.f32 %v196, %v203
      %v206 = vadd.f32 %v197, %v203
      %207 = vst.msk [vmem:[#allocation3] sm:$0xff] %vm190, %v205
      %208 = vst.msk [vmem:[#allocation3 + $0x8] sm:$0xff] %vm190, %v206
    $region21: #{tpu_custom_call.1} parent=1 // pred_fallthru
      _
    // Predicated region
    $region22: #{tpu_custom_call.1} parent=1 // pred_check
      _
    $region23: #{tpu_custom_call.1} parent=1 // pred_check_branch
      %210 = sbr.rel (0) target = $region25
    $region24: #{tpu_custom_call.1} parent=1 // pred_region
      %s212 = ssub.s32 256, 256
      %213 = vsyncadd [#allocation4], %s212
      %s214 = sshll.u32 [#allocation3], 4
      %s215 = int_to_ptr.vmem [resolvable:$true] %s214
      %220 = dma.vmem_to_hbm [thread:$0]  %s215, 256, %s3, [#allocation4], 128, 128, 8
    $region25: #{tpu_custom_call.1} parent=1 // pred_fallthru
      _
    // Predicated region
    $region26: #{tpu_custom_call.1} parent=1 // pred_check
      _
    $region27: #{tpu_custom_call.1} parent=1 // pred_check_branch
      %222 = sbr.rel (0) target = $region29
    $region28: #{tpu_custom_call.1} parent=1 // pred_region
      %223 = dma.done [#allocation4], 256
    $region29: #{tpu_custom_call.1} parent=1 // pred_fallthru
      _
    %224 = vsyncpa [#allocation4], 1

</llo_original>
